<compile_context>
chip_gen: v7x
topology: tpu7x:2x2x1
jax: 0.10.0
libtpu: 0.0.40
codegen_flags: <defaults>
</compile_context>

<pallas_src>
import functools

import jax
import jax.numpy as jnp
from jax import lax
from jax.experimental import pallas as pl
from jax.experimental.pallas import tpu as pltpu


def _sq_kernel(n_valid, m_true, scalars_ref, x_ref, g_ref, et_ref, e_ref, esq_ref,
               quant_ref, counts_ref, loss_ref):
    """One (Nt, D) row-tile of the flattened input per grid step.

    Static (closure): n_valid (true row count), m_true (true codebook size).
    SMEM:   scalars_ref : (2,) f32  [precision = exp(-log_var_q), 1/temperature]
    VMEM in:
      x_ref   : (Nt, D)     f32   row tile of flattened inputs (zero-padded tail)
      g_ref   : (Nt, Mpad)  bf16  Gumbel noise tile
      et_ref  : (D, Mpad)   bf16  codebook^T (grid-invariant, MXU feed order)
      e_ref   : (Mpad, D)   bf16  codebook   (grid-invariant)
      esq_ref : (1, Mpad)   f32   ||e_m||^2  (grid-invariant)
    VMEM out:
      quant_ref  : (Nt, D)        soft-quantized rows
      counts_ref : (1, 1, Mpad)   per-tile sum of argmin one-hots
      loss_ref   : (1, 1, 1)      per-tile sum of (0.5*prec*||x-q||^2 + sum p*logp)
    """
    i = pl.program_id(0)
    nt = x_ref.shape[0]
    m_pad = et_ref.shape[1]

    prec = scalars_ref[0]
    inv_tau = scalars_ref[1]

    x = x_ref[...]                                        # (Nt, D) f32
    xb = x.astype(jnp.bfloat16)
    et = et_ref[...]                                      # (D, Mpad) bf16
    e = e_ref[...]                                        # (Mpad, D) bf16
    e_sq = esq_ref[...]                                   # (1, Mpad) f32

    # logits[n, m] = -0.5*prec*||e_m - x_n||^2 up to a per-row shift (||x||^2
    # dropped: softmax / log_softmax / argmin are shift-invariant along m).
    xe = jnp.dot(xb, et, preferred_element_type=jnp.float32)       # (Nt, Mpad) MXU
    logits = prec * xe - (0.5 * prec) * e_sq

    # Mask padded codebook columns and padded tail rows.
    col = lax.broadcasted_iota(jnp.int32, (nt, m_pad), 1)
    col_ok = col < m_true
    logits = jnp.where(col_ok, logits, jnp.float32(-1e30))

    row = i * nt + lax.broadcasted_iota(jnp.int32, (nt, 1), 0)
    row_ok = row < n_valid                                          # (Nt, 1)

    # Gumbel-softmax (soft) over the codebook axis.
    g = g_ref[...].astype(jnp.float32)
    y = (logits + g) * inv_tau
    y = y - jnp.max(y, axis=-1, keepdims=True)
    ey = jnp.exp(y)
    enc = ey * (jnp.float32(1.0) / jnp.sum(ey, axis=-1, keepdims=True))  # (Nt, Mpad)

    # quantized = encodings @ embedding  (MXU, bf16 in / f32 acc).
    quant = jnp.dot(enc.astype(jnp.bfloat16), e,
                    preferred_element_type=jnp.float32)             # (Nt, D)
    quant_ref[...] = quant

    # Per-row loss: 0.5*prec*||x - quant||^2 + sum_m p*log(p) (folded entropy).
    r = x - quant
    recon = 0.5 * prec * jnp.sum(r * r, axis=-1, keepdims=True)     # (Nt, 1)

    mx = jnp.max(logits, axis=-1, keepdims=True)                    # (Nt, 1)
    z = logits - mx
    ez = jnp.exp(z)
    sez = jnp.sum(ez, axis=-1, keepdims=True)
    ent = (jnp.sum(ez * z, axis=-1, keepdims=True)
           * (jnp.float32(1.0) / sez) - jnp.log(sez))               # (Nt, 1)

    per_row = jnp.where(row_ok, recon + ent, jnp.float32(0.0))
    loss_ref[...] = jnp.sum(per_row, axis=0, keepdims=True).reshape(1, 1, 1)

    # argmin(dist) == argmax(logits); first-occurrence tie-break like torch.argmin.
    is_max = logits == mx
    idx = jnp.min(jnp.where(is_max, col, jnp.int32(m_pad)), axis=-1, keepdims=True)
    onehot = jnp.where(row_ok & (col == idx), jnp.float32(1.0), jnp.float32(0.0))
    counts_ref[...] = jnp.sum(onehot, axis=0, keepdims=True).reshape(1, 1, m_pad)


def _round_up(a, b):
    return -(-a // b) * b


def _pick_row_tile(n, m_pad, d, max_tile, budget_bytes):
    """Row tile: fits a conservative VMEM budget; 256-aligned when large."""
    nt = min(max_tile, _round_up(n, 8))

    def est(t):
        return (16 * t * d          # x + quant f32 tiles, double-buffered
                + 4 * t * m_pad     # gumbel bf16 tile, double-buffered
                + 8 * m_pad * d     # e + e_t bf16, double-buffered (resident)
                + 48 * t * m_pad    # ~12 live (t, Mpad) f32 temporaries
                + 2 * t * d)        # bf16 cast of x

    while nt > 8 and est(nt) > budget_bytes:
        nt //= 2
    nt = max(8, nt)
    if nt >= 256:
        nt = (nt // 256) * 256      # MXU-pass alignment (v6e/v7x 256-wide)
    return _round_up(nt, 8)


def sq_embedding_forward(x, log_var_q, temperature, embedding, key,
                         param_var_q="gaussian_1", max_rows_per_tile=None):
    """Mirrors SQEmbedding.forward -> (quantized, loss, perplexity)."""
    B, S, D = x.shape
    M, D2 = embedding.shape
    assert D == D2, "channels must equal embedding_dim"
    N = B * S

    if param_var_q != "gaussian_1":
        # TODO(synk): gaussian_3 / gaussian_4 (per-row / per-element log-var) not implemented.
        raise NotImplementedError("only param_var_q='gaussian_1' is implemented")

    # Generation-aware VMEM sizing (v5e/v6e: 128 MiB, v7x: 64 MiB per TC).
    try:
        vmem_cap = int(getattr(pltpu.get_tpu_info(), "vmem_capacity_bytes",
                               64 * 1024 * 1024))
    except Exception:
        vmem_cap = 64 * 1024 * 1024
    if max_rows_per_tile is None:
        max_rows_per_tile = 1024 if vmem_cap >= 128 * 1024 * 1024 else 512
    budget = max(32 * 1024 * 1024, vmem_cap // 2)
    vmem_limit = max(48 * 1024 * 1024, min((vmem_cap * 3) // 4, 100 * 1024 * 1024))

    M_pad = _round_up(M, 128)
    nt = _pick_row_tile(N, M_pad, D, max_tile=max_rows_per_tile, budget_bytes=budget)
    n_pad = _round_up(N, nt)
    num_tiles = n_pad // nt

    # Inputs.
    x_flat = x.reshape(N, D).astype(jnp.float32)
    if n_pad != N:
        x_flat = jnp.pad(x_flat, ((0, n_pad - N), (0, 0)))

    emb_f32 = embedding.astype(jnp.float32)
    if M_pad != M:
        emb_f32 = jnp.pad(emb_f32, ((0, M_pad - M), (0, 0)))
    e_bf = emb_f32.astype(jnp.bfloat16)             # (Mpad, D)
    e_t_bf = emb_f32.T.astype(jnp.bfloat16)         # (D, Mpad) pre-transposed
    e_sq = jnp.sum(emb_f32 * emb_f32, axis=1).reshape(1, M_pad)

    # Gumbel noise generated host-side (same distribution as torch's
    # -log(-log(clamped U)); no in-kernel hardware PRNG -> interpret-safe).
    gumbel = jax.random.gumbel(key, (n_pad, M_pad), dtype=jnp.float32)
    gumbel = gumbel.astype(jnp.bfloat16)

    precision = jnp.exp(-jnp.asarray(log_var_q, jnp.float32).reshape(()))
    inv_tau = jnp.float32(1.0) / jnp.asarray(temperature, jnp.float32)
    scalars = jnp.stack([precision, inv_tau]).astype(jnp.float32)

    cost = pl.CostEstimate(
        flops=int(4 * n_pad * M_pad * D + 24 * n_pad * M_pad),
        transcendentals=int(3 * n_pad * M_pad),
        bytes_accessed=int(4 * 2 * n_pad * D + 2 * n_pad * M_pad
                           + 4 * M_pad * D + 4 * M_pad
                           + 4 * num_tiles * (M_pad + 1) + 8),
    )

    quant_pad, counts, loss_part = pl.pallas_call(
        functools.partial(_sq_kernel, N, M),
        grid=(num_tiles,),
        in_specs=[
            pl.BlockSpec(memory_space=pltpu.MemorySpace.SMEM),      # (2,) scalars
            pl.BlockSpec((nt, D), lambda i: (i, 0)),                # x row tile
            pl.BlockSpec((nt, M_pad), lambda i: (i, 0)),            # gumbel tile
            pl.BlockSpec((D, M_pad), lambda i: (0, 0)),             # e^T (resident)
            pl.BlockSpec((M_pad, D), lambda i: (0, 0)),             # e   (resident)
            pl.BlockSpec((1, M_pad), lambda i: (0, 0)),             # ||e||^2 (resident)
        ],
        out_specs=[
            pl.BlockSpec((nt, D), lambda i: (i, 0)),                # quantized tile
            pl.BlockSpec((1, 1, M_pad), lambda i: (i, 0, 0)),       # one-hot counts
            pl.BlockSpec((1, 1, 1), lambda i: (i, 0, 0)),           # loss partial
        ],
        out_shape=[
            jax.ShapeDtypeStruct((n_pad, D), jnp.float32),
            jax.ShapeDtypeStruct((num_tiles, 1, M_pad), jnp.float32),
            jax.ShapeDtypeStruct((num_tiles, 1, 1), jnp.float32),
        ],
        compiler_params=pltpu.CompilerParams(
            dimension_semantics=("parallel",),
            vmem_limit_bytes=int(vmem_limit),
        ),
        cost_estimate=cost,
    )(scalars, x_flat, gumbel, e_t_bf, e_bf, e_sq)

    quantized = quant_pad[:N].reshape(B, S, D)
    # loss = mean over batch of per-batch sums == (total recon + total entropy) / B
    loss = jnp.sum(loss_part) / B
    avg_probs = jnp.sum(counts, axis=(0, 1))[:M] / N
    perplexity = jnp.exp(-jnp.sum(avg_probs * jnp.log(avg_probs + 1e-10)))
    return quantized, loss, perplexity


if __name__ == "__main__":
    # small shapes consistent with the module's forward
    B, S, D = 2, 8, 32        # batch, sample_size, channels (= embedding_dim)
    M = 16                    # n_embeddings

    key = jax.random.PRNGKey(0)
    k_emb, k_x, k_lv, k_g = jax.random.split(key, 4)

    # deterministic "checkpoint-free" parameter init: embedding ~ N(0, 1)
    embedding = jax.random.normal(k_emb, (M, D), dtype=jnp.float32)

    x = jax.random.normal(k_x, (B, S, D), dtype=jnp.float32)
    log_var_q = jax.random.normal(k_lv, (), dtype=jnp.float32) * 0.1  # gaussian_1: scalar
    temperature = 0.5

    quantized, loss, perplexity = sq_embedding_forward(
        x, log_var_q, temperature, embedding, k_g, param_var_q="gaussian_1")

    jax.block_until_ready((quantized, loss, perplexity))
    assert quantized.shape == (B, S, D)
    assert loss.shape == () and perplexity.shape == ()
    assert bool(jnp.isfinite(loss)) and bool(jnp.isfinite(perplexity))
    assert bool(jnp.all(jnp.isfinite(quantized)))
    print("KERNEL_OK")
</pallas_src>

<mosaic_0001>
module attributes {stable_mosaic.version = 11 : i64} {
  func.func @_sq_kernel(%arg0: i32, %arg1: memref<2xf32, #tpu.memory_space<smem>>, %arg2: memref<16x32xf32, #tpu.memory_space<vmem>>, %arg3: memref<16x128xbf16, #tpu.memory_space<vmem>>, %arg4: memref<32x128xbf16, #tpu.memory_space<vmem>>, %arg5: memref<128x32xbf16, #tpu.memory_space<vmem>>, %arg6: memref<1x128xf32, #tpu.memory_space<vmem>>, %arg7: memref<16x32xf32, #tpu.memory_space<vmem>>, %arg8: memref<1x1x128xf32, #tpu.memory_space<vmem>>, %arg9: memref<1x1x1xf32, #tpu.memory_space<vmem>>) attributes {dimension_semantics = [#tpu.dimension_semantics<parallel>], iteration_bounds = array<i64: 1>, scalar_prefetch = 0 : i64, scratch_operands = 0 : i64, tpu.core_type = #tpu.core_type<tc>, window_params = [{transform_indices = @transform_0, window_bounds = array<i64: 2>}, {transform_indices = @transform_1, window_bounds = array<i64: 16, 32>}, {transform_indices = @transform_2, window_bounds = array<i64: 16, 128>}, {pipeline_mode = #tpu.pipeline_mode<synchronous>, transform_indices = @transform_3, window_bounds = array<i64: 32, 128>}, {pipeline_mode = #tpu.pipeline_mode<synchronous>, transform_indices = @transform_4, window_bounds = array<i64: 128, 32>}, {pipeline_mode = #tpu.pipeline_mode<synchronous>, transform_indices = @transform_5, window_bounds = array<i64: 1, 128>}, {transform_indices = @transform_6, window_bounds = array<i64: 16, 32>}, {transform_indices = @transform_7, window_bounds = array<i64: 1, 1, 128>}, {transform_indices = @transform_8, window_bounds = array<i64: 1, 1, 1>}]} {
    %c0 = arith.constant 0 : index
    %0 = memref.load %arg1[%c0] : memref<2xf32, #tpu.memory_space<smem>>
    %c1 = arith.constant 1 : index
    %1 = memref.load %arg1[%c1] : memref<2xf32, #tpu.memory_space<smem>>
    %c0_0 = arith.constant 0 : index
    %c0_1 = arith.constant 0 : index
    %2 = vector.load %arg2[%c0_0, %c0_1] : memref<16x32xf32, #tpu.memory_space<vmem>>, vector<16x32xf32>
    %3 = arith.truncf %2 : vector<16x32xf32> to vector<16x32xbf16>
    %c0_2 = arith.constant 0 : index
    %c0_3 = arith.constant 0 : index
    %4 = vector.load %arg4[%c0_2, %c0_3] : memref<32x128xbf16, #tpu.memory_space<vmem>>, vector<32x128xbf16>
    %c0_4 = arith.constant 0 : index
    %c0_5 = arith.constant 0 : index
    %5 = vector.load %arg5[%c0_4, %c0_5] : memref<128x32xbf16, #tpu.memory_space<vmem>>, vector<128x32xbf16>
    %c0_6 = arith.constant 0 : index
    %c0_7 = arith.constant 0 : index
    %6 = vector.load %arg6[%c0_6, %c0_7] : memref<1x128xf32, #tpu.memory_space<vmem>>, vector<1x128xf32>
    %cst = arith.constant dense<0.000000e+00> : vector<16x128xf32>
    %7 = tpu.matmul %3, %4, %cst {dimension_numbers = #tpu.dot_dimension_numbers<[1], [0], [0], [1], [0, 0, 1, 1], [], []>} : vector<16x32xbf16>, vector<32x128xbf16>, vector<16x128xf32> -> vector<16x128xf32>
    %8 = vector.broadcast %0 : f32 to vector<16x128xf32>
    %9 = arith.mulf %8, %7 : vector<16x128xf32>
    %cst_8 = arith.constant 5.000000e-01 : f32
    %10 = arith.mulf %cst_8, %0 : f32
    %11 = vector.broadcast %10 : f32 to vector<1x128xf32>
    %12 = arith.mulf %11, %6 : vector<1x128xf32>
    %13 = vector.broadcast %12 : vector<1x128xf32> to vector<16x128xf32>
    %14 = arith.subf %9, %13 : vector<16x128xf32>
    %15 = tpu.iota {dimensions = array<i32: 1>} : vector<16x128xi32>
    %c16_i32 = arith.constant 16 : i32
    %16 = vector.broadcast %c16_i32 : i32 to vector<16x128xi32>
    %17 = arith.cmpi slt, %15, %16 : vector<16x128xi32>
    %cst_9 = arith.constant -1.000000e+30 : f32
    %18 = vector.broadcast %cst_9 : f32 to vector<16x128xf32>
    %19 = arith.select %17, %14, %18 : vector<16x128xi1>, vector<16x128xf32>
    %c16_i32_10 = arith.constant 16 : i32
    %20 = arith.muli %arg0, %c16_i32_10 : i32
    %21 = tpu.iota {dimensions = array<i32: 0>} : vector<16x1xi32>
    %22 = vector.broadcast %20 : i32 to vector<16x1xi32>
    %23 = arith.addi %22, %21 : vector<16x1xi32>
    %c16_i32_11 = arith.constant 16 : i32
    %24 = vector.broadcast %c16_i32_11 : i32 to vector<16x1xi32>
    %25 = arith.cmpi slt, %23, %24 : vector<16x1xi32>
    %c0_12 = arith.constant 0 : index
    %c0_13 = arith.constant 0 : index
    %26 = vector.load %arg3[%c0_12, %c0_13] : memref<16x128xbf16, #tpu.memory_space<vmem>>, vector<16x128xbf16>
    %27 = arith.extf %26 : vector<16x128xbf16> to vector<16x128xf32>
    %28 = arith.addf %19, %27 : vector<16x128xf32>
    %29 = vector.broadcast %1 : f32 to vector<16x128xf32>
    %30 = arith.mulf %28, %29 : vector<16x128xf32>
    %cst_14 = arith.constant dense<0xFF800000> : vector<16xf32>
    %31 = vector.multi_reduction <maximumf>, %30, %cst_14 [1] : vector<16x128xf32> to vector<16xf32>
    %32 = vector.shape_cast %31 : vector<16xf32> to vector<16x1xf32>
    %33 = vector.broadcast %32 : vector<16x1xf32> to vector<16x128xf32>
    %34 = arith.subf %30, %33 : vector<16x128xf32>
    %35 = math.exp %34 : vector<16x128xf32>
    %cst_15 = arith.constant dense<0.000000e+00> : vector<16xf32>
    %36 = vector.multi_reduction <add>, %35, %cst_15 [1] : vector<16x128xf32> to vector<16xf32>
    %37 = vector.shape_cast %36 : vector<16xf32> to vector<16x1xf32>
    %cst_16 = arith.constant 1.000000e+00 : f32
    %38 = vector.broadcast %cst_16 : f32 to vector<16x1xf32>
    %39 = arith.divf %38, %37 : vector<16x1xf32>
    %40 = vector.broadcast %39 : vector<16x1xf32> to vector<16x128xf32>
    %41 = arith.mulf %35, %40 : vector<16x128xf32>
    %42 = arith.truncf %41 : vector<16x128xf32> to vector<16x128xbf16>
    %cst_17 = arith.constant dense<0.000000e+00> : vector<16x32xf32>
    %43 = tpu.matmul %42, %5, %cst_17 {dimension_numbers = #tpu.dot_dimension_numbers<[1], [0], [0], [1], [0, 0, 1, 1], [], []>} : vector<16x128xbf16>, vector<128x32xbf16>, vector<16x32xf32> -> vector<16x32xf32>
    %c0_18 = arith.constant 0 : index
    %c0_19 = arith.constant 0 : index
    %44 = vector.load %arg7[%c0_18, %c0_19] : memref<16x32xf32, #tpu.memory_space<vmem>>, vector<16x32xf32>
    tpu.vector_store %arg7[%c0_18, %c0_19], %43 {strides = array<i32>} : memref<16x32xf32, #tpu.memory_space<vmem>>, vector<16x32xf32>,
    %45 = arith.subf %2, %43 : vector<16x32xf32>
    %cst_20 = arith.constant 5.000000e-01 : f32
    %46 = arith.mulf %cst_20, %0 : f32
    %47 = arith.mulf %45, %45 : vector<16x32xf32>
    %cst_21 = arith.constant dense<0.000000e+00> : vector<16xf32>
    %48 = vector.multi_reduction <add>, %47, %cst_21 [1] : vector<16x32xf32> to vector<16xf32>
    %49 = vector.shape_cast %48 : vector<16xf32> to vector<16x1xf32>
    %50 = vector.broadcast %46 : f32 to vector<16x1xf32>
    %51 = arith.mulf %50, %49 : vector<16x1xf32>
    %cst_22 = arith.constant dense<0xFF800000> : vector<16xf32>
    %52 = vector.multi_reduction <maximumf>, %19, %cst_22 [1] : vector<16x128xf32> to vector<16xf32>
    %53 = vector.shape_cast %52 : vector<16xf32> to vector<16x1xf32>
    %54 = vector.broadcast %53 : vector<16x1xf32> to vector<16x128xf32>
    %55 = arith.subf %19, %54 : vector<16x128xf32>
    %56 = math.exp %55 : vector<16x128xf32>
    %cst_23 = arith.constant dense<0.000000e+00> : vector<16xf32>
    %57 = vector.multi_reduction <add>, %56, %cst_23 [1] : vector<16x128xf32> to vector<16xf32>
    %58 = vector.shape_cast %57 : vector<16xf32> to vector<16x1xf32>
    %59 = arith.mulf %56, %55 : vector<16x128xf32>
    %cst_24 = arith.constant dense<0.000000e+00> : vector<16xf32>
    %60 = vector.multi_reduction <add>, %59, %cst_24 [1] : vector<16x128xf32> to vector<16xf32>
    %61 = vector.shape_cast %60 : vector<16xf32> to vector<16x1xf32>
    %cst_25 = arith.constant 1.000000e+00 : f32
    %62 = vector.broadcast %cst_25 : f32 to vector<16x1xf32>
    %63 = arith.divf %62, %58 : vector<16x1xf32>
    %64 = arith.mulf %61, %63 : vector<16x1xf32>
    %65 = math.log %58 : vector<16x1xf32>
    %66 = arith.subf %64, %65 : vector<16x1xf32>
    %67 = arith.addf %51, %66 : vector<16x1xf32>
    %cst_26 = arith.constant 0.000000e+00 : f32
    %68 = vector.broadcast %cst_26 : f32 to vector<16x1xf32>
    %69 = arith.select %25, %67, %68 : vector<16x1xi1>, vector<16x1xf32>
    %cst_27 = arith.constant dense<0.000000e+00> : vector<1xf32>
    %70 = vector.multi_reduction <add>, %69, %cst_27 [0] : vector<16x1xf32> to vector<1xf32>
    %71 = vector.shape_cast %70 : vector<1xf32> to vector<1x1xf32>
    %72 = vector.shape_cast %71 : vector<1x1xf32> to vector<1x1x1xf32>
    %c0_28 = arith.constant 0 : index
    %c0_29 = arith.constant 0 : index
    %c0_30 = arith.constant 0 : index
    %73 = vector.load %arg9[%c0_28, %c0_29, %c0_30] : memref<1x1x1xf32, #tpu.memory_space<vmem>>, vector<1x1x1xf32>
    tpu.vector_store %arg9[%c0_28, %c0_29, %c0_30], %72 {strides = array<i32>} : memref<1x1x1xf32, #tpu.memory_space<vmem>>, vector<1x1x1xf32>,
    %74 = vector.broadcast %53 : vector<16x1xf32> to vector<16x128xf32>
    %75 = arith.cmpf oeq, %19, %74 : vector<16x128xf32>
    %c128_i32 = arith.constant 128 : i32
    %76 = vector.broadcast %c128_i32 : i32 to vector<16x128xi32>
    %77 = arith.select %75, %15, %76 : vector<16x128xi1>, vector<16x128xi32>
    %cst_31 = arith.constant dense<2147483647> : vector<16xi32>
    %78 = vector.multi_reduction <minsi>, %77, %cst_31 [1] : vector<16x128xi32> to vector<16xi32>
    %79 = vector.shape_cast %78 : vector<16xi32> to vector<16x1xi32>
    %80 = vector.broadcast %79 : vector<16x1xi32> to vector<16x128xi32>
    %81 = arith.cmpi eq, %15, %80 : vector<16x128xi32>
    %82 = vector.broadcast %25 : vector<16x1xi1> to vector<16x128xi1>
    %83 = arith.andi %82, %81 : vector<16x128xi1>
    %cst_32 = arith.constant 1.000000e+00 : f32
    %cst_33 = arith.constant 0.000000e+00 : f32
    %84 = vector.broadcast %cst_32 : f32 to vector<16x128xf32>
    %85 = vector.broadcast %cst_33 : f32 to vector<16x128xf32>
    %86 = arith.select %83, %84, %85 : vector<16x128xi1>, vector<16x128xf32>
    %cst_34 = arith.constant dense<0.000000e+00> : vector<128xf32>
    %87 = vector.multi_reduction <add>, %86, %cst_34 [0] : vector<16x128xf32> to vector<128xf32>
    %88 = vector.shape_cast %87 : vector<128xf32> to vector<1x128xf32>
    %89 = vector.shape_cast %88 : vector<1x128xf32> to vector<1x1x128xf32>
    %c0_35 = arith.constant 0 : index
    %c0_36 = arith.constant 0 : index
    %c0_37 = arith.constant 0 : index
    %90 = vector.load %arg8[%c0_35, %c0_36, %c0_37] : memref<1x1x128xf32, #tpu.memory_space<vmem>>, vector<1x1x128xf32>
    tpu.vector_store %arg8[%c0_35, %c0_36, %c0_37], %89 {strides = array<i32>} : memref<1x1x128xf32, #tpu.memory_space<vmem>>, vector<1x1x128xf32>,
    return
  }
  func.func @transform_0(%arg0: i32) -> i32 {
    %c0_i32 = arith.constant 0 : i32
    %c0_i32_0 = arith.constant 0 : i32
    return %c0_i32 : i32
  }
  func.func @transform_1(%arg0: i32) -> (i32, i32) {
    %c0_i32 = arith.constant 0 : i32
    %c0_i32_0 = arith.constant 0 : i32
    return %arg0, %c0_i32 : i32, i32
  }
  func.func @transform_2(%arg0: i32) -> (i32, i32) {
    %c0_i32 = arith.constant 0 : i32
    %c0_i32_0 = arith.constant 0 : i32
    return %arg0, %c0_i32 : i32, i32
  }
  func.func @transform_3(%arg0: i32) -> (i32, i32) {
    %c0_i32 = arith.constant 0 : i32
    %c0_i32_0 = arith.constant 0 : i32
    %c0_i32_1 = arith.constant 0 : i32
    return %c0_i32, %c0_i32_0 : i32, i32
  }
  func.func @transform_4(%arg0: i32) -> (i32, i32) {
    %c0_i32 = arith.constant 0 : i32
    %c0_i32_0 = arith.constant 0 : i32
    %c0_i32_1 = arith.constant 0 : i32
    return %c0_i32, %c0_i32_0 : i32, i32
  }
  func.func @transform_5(%arg0: i32) -> (i32, i32) {
    %c0_i32 = arith.constant 0 : i32
    %c0_i32_0 = arith.constant 0 : i32
    %c0_i32_1 = arith.constant 0 : i32
    return %c0_i32, %c0_i32_0 : i32, i32
  }
  func.func @transform_6(%arg0: i32) -> (i32, i32) {
    %c0_i32 = arith.constant 0 : i32
    %c0_i32_0 = arith.constant 0 : i32
    return %arg0, %c0_i32 : i32, i32
  }
  func.func @transform_7(%arg0: i32) -> (i32, i32, i32) {
    %c0_i32 = arith.constant 0 : i32
    %c0_i32_0 = arith.constant 0 : i32
    %c0_i32_1 = arith.constant 0 : i32
    return %arg0, %c0_i32, %c0_i32_0 : i32, i32, i32
  }
  func.func @transform_8(%arg0: i32) -> (i32, i32, i32) {
    %c0_i32 = arith.constant 0 : i32
    %c0_i32_0 = arith.constant 0 : i32
    %c0_i32_1 = arith.constant 0 : i32
    return %arg0, %c0_i32, %c0_i32_0 : i32, i32, i32
  }
}

</mosaic_0001>

<llo_original>
// kernel: tpu_custom_call.1
$region0: #{tpu_custom_call.1}
  #allocation0 [shape = 'u32[]', space=smem, size = 0x4, offset = 0x4, fixed_abs, tag = 'smem constant byte address 0x4 - core index']
  #allocation1 [shape = 'u32[144,128]{1,0:T(1,128)}', space=vmem, size = 0x12000, scoped, tag = 'internal scratch']
  %s0 = inlined_call_operand.vmem [shape: f32[2], index: 0, kind: input, shape index: {}]
  %s1 = inlined_call_operand.vmem [shape: f32[16,32], index: 1, kind: input, shape index: {}]
  %s2 = inlined_call_operand.vmem [shape: bf16[16,128], index: 2, kind: input, shape index: {}]
  %s3 = inlined_call_operand.vmem [shape: bf16[32,128], index: 3, kind: input, shape index: {}]
  %s4 = inlined_call_operand.vmem [shape: bf16[128,32], index: 4, kind: input, shape index: {}]
  %s5 = inlined_call_operand.vmem [shape: f32[1,128], index: 5, kind: input, shape index: {}]
  %s6 = inlined_call_operand.hbm [shape: f32[16,32], index: 6, kind: output, shape index: {0}]
  %s7 = inlined_call_operand.hbm [shape: f32[1,1,128], index: 7, kind: output, shape index: {1}]
  %s8 = inlined_call_operand.hbm [shape: f32[1,1,1], index: 8, kind: output, shape index: {2}]
  %9 = xla_tuple %s6, %s7, %s8
  %s10 = sld [smem:[#allocation0]]
  $region54: #{tpu_custom_call.1} parent=0
    _
  %s12 = ssub.s32 1, %s10
  %s13 = scalar_select 0, %s12, %s10
  $region1: #{tpu_custom_call.1} parent=0
    #allocation2 [shape = 'u8[512]{0}', space=smem, size = 0x200, scoped, tag = 'input window, operand 0, single buffered']
    #allocation3 [shape = 's32[1]{0}', space=sflag, size = 0x4, scoped, tag = 'scoped memory for tpu_custom_call.1']
    #allocation4 [shape = 's32[1]{0}', space=sflag, size = 0x4, scoped, tag = 'scoped memory for tpu_custom_call.1']
    #allocation5 [shape = 'u8[8192]{0}', space=vmem, size = 0x2000, scoped, tag = 'output window, operand 0, single buffered']
    #allocation6 [shape = 'u8[512]{0}', space=vmem, size = 0x400, scoped, tag = 'output window, operand 1, single buffered']
    #allocation7 [shape = 's32[1]{0}', space=sflag, size = 0x4, scoped, tag = 'scoped memory for tpu_custom_call.1']
    #allocation8 [shape = 'u8[512]{0}', space=vmem, size = 0x400, scoped, tag = 'output window, operand 2, single buffered']
    %14 = vsyncpa [#allocation4], 0
    %15 = vsyncpa [#allocation3], 0
    %16 = vsyncpa [#allocation7], 0
    // Predicated region
    $region2: #{tpu_custom_call.1} parent=1 // pred_check
      _
    $region3: #{tpu_custom_call.1} parent=1 // pred_check_branch
      %18 = sbr.rel (0) target = $region5
    $region4: #{tpu_custom_call.1} parent=1 // pred_region
      %s20 = ssub.s32 16, 16
      %21 = vsyncadd [#allocation4], %s20
      %s23 = sshll.u32 %s0, 4
      %s24 = int_to_ptr.vmem [resolvable:$true] %s23
      %26 = dma.vmem_to_smem %s24, 16, [#allocation2], [#allocation4]
    $region5: #{tpu_custom_call.1} parent=1 // pred_fallthru
      _
    // Predicated region
    $region6: #{tpu_custom_call.1} parent=1 // pred_check
      _
    $region7: #{tpu_custom_call.1} parent=1 // pred_check_branch
      %28 = sbr.rel (0) target = $region9
    $region8: #{tpu_custom_call.1} parent=1 // pred_region
      _
    $region9: #{tpu_custom_call.1} parent=1 // pred_fallthru
      _
    // Predicated region
    $region10: #{tpu_custom_call.1} parent=1 // pred_check
      _
    $region11: #{tpu_custom_call.1} parent=1 // pred_check_branch
      %30 = sbr.rel (0) target = $region13
    $region12: #{tpu_custom_call.1} parent=1 // pred_region
      _
    $region13: #{tpu_custom_call.1} parent=1 // pred_fallthru
      _
    // Predicated region
    $region14: #{tpu_custom_call.1} parent=1 // pred_check
      _
    $region15: #{tpu_custom_call.1} parent=1 // pred_check_branch
      %32 = sbr.rel (0) target = $region17
    $region16: #{tpu_custom_call.1} parent=1 // pred_region
      _
    $region17: #{tpu_custom_call.1} parent=1 // pred_fallthru
      _
    // Predicated region
    $region18: #{tpu_custom_call.1} parent=1 // pred_check
      _
    $region19: #{tpu_custom_call.1} parent=1 // pred_check_branch
      %34 = sbr.rel (0) target = $region21
    $region20: #{tpu_custom_call.1} parent=1 // pred_region
      _
    $region21: #{tpu_custom_call.1} parent=1 // pred_fallthru
      _
    // Predicated region
    $region22: #{tpu_custom_call.1} parent=1 // pred_check
      _
    $region23: #{tpu_custom_call.1} parent=1 // pred_check_branch
      %36 = sbr.rel (0) target = $region25
    $region24: #{tpu_custom_call.1} parent=1 // pred_region
      _
    $region25: #{tpu_custom_call.1} parent=1 // pred_fallthru
      _
    // Predicated region
    $region26: #{tpu_custom_call.1} parent=1 // pred_check
      _
    $region27: #{tpu_custom_call.1} parent=1 // pred_check_branch
      %38 = sbr.rel (0) target = $region29
    $region28: #{tpu_custom_call.1} parent=1 // pred_region
      %39 = dma.done [#allocation4], 16
    $region29: #{tpu_custom_call.1} parent=1 // pred_fallthru
      _
    %40 = sfence
    %s42 = sld [smem:[#allocation2]]
    %s43 = sld [smem:[#allocation2 + $0x1]]
    %v44 = vld [vmem:[%s1] sm:$0xff]
    %v45 = vld [vmem:[%s1 + $0x8] sm:$0xff]
    %v46 = vpack.c.bf16 %v45, %v44
    %v47 = vld [vmem:[%s3] sm:$0xf]
    %v48 = vld [vmem:[%s3 + $0x4] sm:$0xf]
    %v49 = vld [vmem:[%s3 + $0x8] sm:$0xf]
    %v50 = vld [vmem:[%s3 + $0xc] sm:$0xf]
    %v51 = vld [vmem:[%s4] sm:$0xf]
    %v52 = vld [vmem:[%s4 + $0x4] sm:$0xf]
    %v53 = vld [vmem:[%s4 + $0x8] sm:$0xf]
    %v54 = vld [vmem:[%s4 + $0xc] sm:$0xf]
    %v55 = vld [vmem:[%s4 + $0x10] sm:$0xf]
    %v56 = vld [vmem:[%s4 + $0x14] sm:$0xf]
    %v57 = vld [vmem:[%s4 + $0x18] sm:$0xf]
    %v58 = vld [vmem:[%s4 + $0x1c] sm:$0xf]
    %v59 = vld [vmem:[%s4 + $0x20] sm:$0xf]
    %v60 = vld [vmem:[%s4 + $0x24] sm:$0xf]
    %v61 = vld [vmem:[%s4 + $0x28] sm:$0xf]
    %v62 = vld [vmem:[%s4 + $0x2c] sm:$0xf]
    %v63 = vld [vmem:[%s4 + $0x30] sm:$0xf]
    %v64 = vld [vmem:[%s4 + $0x34] sm:$0xf]
    %v65 = vld [vmem:[%s4 + $0x38] sm:$0xf]
    %v66 = vld [vmem:[%s4 + $0x3c] sm:$0xf]
    %v67 = vld [vmem:[%s5] sm:$0x1]
    %v72 = vunpack.c.l.b16 %v47
    %v73 = vunpack.c.l.b16 %v48
    %v74 = vunpack.c.l.b16 %v49
    %v75 = vunpack.c.l.b16 %v50
    %v76 = vpack.c.b16 %v73, %v72
    %v77 = vpack.c.b16 %v75, %v74
    %vm80 = vcmask 261120
    %v82 = vsel %vm80, %v46, 0
    %84 = vmatprep.subr.bf16.mxu0 0
    %85 = vmatpush1.bf16.msra.mxu0 %v76
    %86 = vmatprep.subr.bf16.mxu0 0
    %87 = vmatpush1.bf16.msra.mxu0 %v77
    %88 = vmatprep.subr.bf16.mxu0 0
    %89 = vmatpush1.bf16.msra.mxu0 0
    %90 = vmatprep.subr.bf16.mxu0 0
    %91 = vmatpush1.bf16.msra.mxu0 0
    %92 = vmatprep.subr.bf16.mxu0 0
    %93 = vmatpush1.bf16.msra.mxu0 0
    %94 = vmatprep.subr.bf16.mxu0 0
    %95 = vmatpush1.bf16.msra.mxu0 0
    %96 = vmatprep.subr.bf16.mxu0 0
    %97 = vmatpush1.bf16.msra.mxu0 0
    %98 = vmatprep.subr.bf16.mxu0 0
    %99 = vmatpush1.bf16.msra.mxu0 0
    %100 = vmatprep.subr.bf16.mxu0 0
    %101 = vmatpush1.bf16.msra.mxu0 0
    %102 = vmatprep.subr.bf16.mxu0 0
    %103 = vmatpush1.bf16.msra.mxu0 0
    %104 = vmatprep.subr.bf16.mxu0 0
    %105 = vmatpush1.bf16.msra.mxu0 0
    %106 = vmatprep.subr.bf16.mxu0 0
    %107 = vmatpush1.bf16.msra.mxu0 0
    %108 = vmatprep.subr.bf16.mxu0 0
    %109 = vmatpush1.bf16.msra.mxu0 0
    %110 = vmatprep.subr.bf16.mxu0 0
    %111 = vmatpush1.bf16.msra.mxu0 0
    %112 = vmatprep.subr.bf16.mxu0 0
    %113 = vmatpush1.bf16.msra.mxu0 0
    %114 = vmatprep.subr.bf16.mxu0 0
    %115 = vmatpush1.bf16.msra.mxu0 0
    %116 = vmatprep.mubr.bf16.mxu0 0
    %117 = vmatmul.mubr.bf16.gmra.mrb[0].mxu0 %v82
    %v118 = vpop.f32.mrb[0].mxu0
    %v119 = vadd.f32 0.0, %v118
    %v120 = vpop.f32.mrb[0].mxu0
    %v121 = vpop.f32.mrb[0].mxu0
    %v122 = vadd.f32 0.0, %v121
    %v123 = vpop.f32.mrb[0].mxu0
    %124 = vdwg.mxu0
    %v125 = vstv %s42
    %v126 = vmul.f32 %v125, %v119
    %v127 = vmul.f32 %v125, %v122
    %s128 = smul.f32 %s42, 0.5
    %v129 = vstv %s128
    %v130 = vmul.f32 %v129, %v67
    %v132 = vlaneseq
    %v133 = vshrl.u32 %v132, 7
    %v134 = vsub.s32 0, %v133
    %v135 = vrot.slane %v130, %v134
    %v137 = vsub.f32 %v126, %v135
    %v138 = vsub.f32 %v127, %v135
    %v139 = vlaneseq
    %v140 = vand.u32 %v139, 127
    %vm141 = vcmp.lt.s32.totalorder %v140, 16
    %v142 = vsel %vm141, %v137, -1e+30
    %v143 = vsel %vm141, %v138, -1e+30
    %s144 = smul.u32 0, 16
    %v145 = vlaneseq
    %v146 = vshrl.u32 %v145, 7
    %v147 = vadd.s32 %v146, 8
    %v148 = vstv %s144
    %v149 = vadd.s32 %v148, %v146
    %v150 = vadd.s32 %v148, %v147
    %vm151 = vcmp.lt.s32.totalorder %v149, 16
    %vm152 = vcmp.lt.s32.totalorder %v150, 16
    %v153 = vld [vmem:[%s2] sm:$0xf]
    %v154 = vld [vmem:[%s2 + $0x4] sm:$0xf]
    %v155 = vunpack.c.l.bf16 %v153
    %v156 = vunpack.c.l.bf16 %v154
    %v157 = vadd.f32 %v142, %v155
    %v158 = vadd.f32 %v143, %v156
    %v159 = vstv %s43
    %v160 = vmul.f32 %v157, %v159
    %v161 = vmul.f32 %v158, %v159
    %162 = vmax.xlane.f32.xlu0 %v160
    %v163 = vpop.xlane.xlu0 %162
    %164 = vmax.xlane.f32.xlu0 %v161
    %v165 = vpop.xlane.xlu0 %164
    %v166 = vsub.f32 %v160, %v163
    %v167 = vsub.f32 %v161, %v165
    %v168 = vmul.f32 %v166, 1.442695
    %v169 = vpow.pop %v168
    %v170 = vmul.f32 %v167, 1.442695
    %v171 = vpow.pop %v170
    %172 = vadd.xlane.f32.xlu0 %v169
    %v173 = vpop.xlane.xlu0 %172
    %174 = vadd.xlane.f32.xlu0 %v171
    %v175 = vpop.xlane.xlu0 %174
    %v176 = vrcp.pop %v173
    %v177 = vmul.f32 1.0, %v176
    %v178 = vrcp.pop %v175
    %v179 = vmul.f32 1.0, %v178
    %v180 = vmul.f32 %v169, %v177
    %v181 = vmul.f32 %v171, %v179
    %v182 = vpack.c.bf16 %v181, %v180
    %v199 = vunpack.c.l.b16 %v51
    %v200 = vunpack.c.l.b16 %v52
    %v201 = vunpack.c.l.b16 %v53
    %v202 = vunpack.c.l.b16 %v54
    %v203 = vunpack.c.l.b16 %v55
    %v204 = vunpack.c.l.b16 %v56
    %v205 = vunpack.c.l.b16 %v57
    %v206 = vunpack.c.l.b16 %v58
    %v207 = vunpack.c.l.b16 %v59
    %v208 = vunpack.c.l.b16 %v60
    %v209 = vunpack.c.l.b16 %v61
    %v210 = vunpack.c.l.b16 %v62
    %v211 = vunpack.c.l.b16 %v63
    %v212 = vunpack.c.l.b16 %v64
    %v213 = vunpack.c.l.b16 %v65
    %v214 = vunpack.c.l.b16 %v66
    %v215 = vpack.c.b16 %v200, %v199
    %v216 = vpack.c.b16 %v202, %v201
    %v217 = vpack.c.b16 %v204, %v203
    %v218 = vpack.c.b16 %v206, %v205
    %v219 = vpack.c.b16 %v208, %v207
    %v220 = vpack.c.b16 %v210, %v209
    %v221 = vpack.c.b16 %v212, %v211
    %v222 = vpack.c.b16 %v214, %v213
    %231 = vmatprep.subr.bf16.mxu0 0
    %232 = vmatpush1.bf16.msra.mxu0 %v215
    %233 = vmatprep.subr.bf16.mxu0 0
    %234 = vmatpush1.bf16.msra.mxu0 %v216
    %235 = vmatprep.subr.bf16.mxu0 0
    %236 = vmatpush1.bf16.msra.mxu0 %v217
    %237 = vmatprep.subr.bf16.mxu0 0
    %238 = vmatpush1.bf16.msra.mxu0 %v218
    %239 = vmatprep.subr.bf16.mxu0 0
    %240 = vmatpush1.bf16.msra.mxu0 %v219
    %241 = vmatprep.subr.bf16.mxu0 0
    %242 = vmatpush1.bf16.msra.mxu0 %v220
    %243 = vmatprep.subr.bf16.mxu0 0
    %244 = vmatpush1.bf16.msra.mxu0 %v221
    %245 = vmatprep.subr.bf16.mxu0 0
    %246 = vmatpush1.bf16.msra.mxu0 %v222
    %247 = vmatprep.subr.bf16.mxu0 0
    %248 = vmatpush1.bf16.msra.mxu0 0
    %249 = vmatprep.subr.bf16.mxu0 0
    %250 = vmatpush1.bf16.msra.mxu0 0
    %251 = vmatprep.subr.bf16.mxu0 0
    %252 = vmatpush1.bf16.msra.mxu0 0
    %253 = vmatprep.subr.bf16.mxu0 0
    %254 = vmatpush1.bf16.msra.mxu0 0
    %255 = vmatprep.subr.bf16.mxu0 0
    %256 = vmatpush1.bf16.msra.mxu0 0
    %257 = vmatprep.subr.bf16.mxu0 0
    %258 = vmatpush1.bf16.msra.mxu0 0
    %259 = vmatprep.subr.bf16.mxu0 0
    %260 = vmatpush1.bf16.msra.mxu0 0
    %261 = vmatprep.subr.bf16.mxu0 0
    %262 = vmatpush1.bf16.msra.mxu0 0
    %263 = vmatprep.mubr.bf16.mxu0 0
    %264 = vmatmul.mubr.bf16.gmra.mrb[0].mxu0 %v182
    %v265 = vpop.f32.mrb[0].mxu0
    %v266 = vadd.f32 0.0, %v265
    %v267 = vpop.f32.mrb[0].mxu0
    %v268 = vpop.f32.mrb[0].mxu0
    %v269 = vadd.f32 0.0, %v268
    %v270 = vpop.f32.mrb[0].mxu0
    %271 = vdwg.mxu0
    %272 = vst.msk [vmem:[#allocation5] sm:$0xff] %vm80, %v266
    %273 = vst.msk [vmem:[#allocation5 + $0x8] sm:$0xff] %vm80, %v269
    %v274 = vsub.f32 %v44, %v266
    %v275 = vsub.f32 %v45, %v269
    %v276 = vmul.f32 %v274, %v274
    %v277 = vmul.f32 %v275, %v275
    %v278 = vsel %vm80, %v276, 0.0
    %279 = vadd.xlane.f32.xlu0 %v278
    %v280 = vpop.xlane.xlu0 %279
    %v281 = vsel %vm80, %v277, 0.0
    %282 = vadd.xlane.f32.xlu0 %v281
    %v283 = vpop.xlane.xlu0 %282
    %v284 = vmul.f32 %v129, %v280
    %v285 = vmul.f32 %v129, %v283
    %286 = vmax.xlane.f32.xlu0 %v142
    %v287 = vpop.xlane.xlu0 %286
    %288 = vmax.xlane.f32.xlu0 %v143
    %v289 = vpop.xlane.xlu0 %288
    %v290 = vsub.f32 %v142, %v287
    %v291 = vsub.f32 %v143, %v289
    %v292 = vmul.f32 %v290, 1.442695
    %v293 = vpow.pop %v292
    %v294 = vmul.f32 %v291, 1.442695
    %v295 = vpow.pop %v294
    %296 = vadd.xlane.f32.xlu0 %v293
    %v297 = vpop.xlane.xlu0 %296
    %298 = vadd.xlane.f32.xlu0 %v295
    %v299 = vpop.xlane.xlu0 %298
    %v300 = vmul.f32 %v293, %v290
    %v301 = vmul.f32 %v295, %v291
    %302 = vadd.xlane.f32.xlu0 %v300
    %v303 = vpop.xlane.xlu0 %302
    %304 = vadd.xlane.f32.xlu0 %v301
    %v305 = vpop.xlane.xlu0 %304
    %v306 = vrcp.pop %v297
    %v307 = vmul.f32 1.0, %v306
    %v308 = vrcp.pop %v299
    %v309 = vmul.f32 1.0, %v308
    %v310 = vmul.f32 %v303, %v307
    %v311 = vmul.f32 %v305, %v309
    %v312 = vlog2.pop %v297
    %v313 = vmul.f32 %v312, 0.6931472
    %v314 = vlog2.pop %v299
    %v315 = vmul.f32 %v314, 0.6931472
    %v316 = vsub.f32 %v310, %v313
    %v317 = vsub.f32 %v311, %v315
    %v318 = vadd.f32 %v284, %v316
    %v319 = vadd.f32 %v285, %v317
    %v320 = vsel %vm151, %v318, 0.0
    %v321 = vsel %vm152, %v319, 0.0
    %v322 = vadd.f32 %v320, %v321
    %v323 = vrot.slane %v322, 4
    %v324 = vadd.f32 %v322, %v323
    %v325 = vrot.slane %v324, 2
    %v326 = vadd.f32 %v324, %v325
    %v327 = vrot.slane %v326, 1
    %v328 = vadd.f32 %v326, %v327
    %vm329 = vcmask 0
    %330 = vst.msk [vmem:[#allocation8] sm:$0x1] %vm329, %v328
    %vm331 = vcmp.eq.f32.partialorder %v142, %v287
    %vm332 = vcmp.eq.f32.partialorder %v143, %v289
    %v333 = vsel %vm331, %v140, 128
    %v334 = vsel %vm332, %v140, 128
    %v335 = vand.u32 %v333, 65535
    %v336 = vshra.s32 %v333, 16
    %v337 = vcvt.s32.f32 %v335
    %v338 = vcvt.s32.f32 %v336
    %339 = vmin.xlane.f32.xlu0 %v338
    %v340 = vpop.xlane.xlu0 %339
    %vm341 = vcmp.eq.f32.partialorder %v338, %v340
    %v342 = vsel %vm341, %v337, inf
    %343 = vmin.xlane.f32.xlu0 %v342
    %v344 = vpop.xlane.xlu0 %343
    %v345 = vcvt.f32.s32 %v344
    %v346 = vcvt.f32.s32 %v340
    %v347 = vshll.u32 %v346, 16
    %v348 = vadd.s32 %v347, %v345
    %v349 = vand.u32 %v334, 65535
    %v350 = vshra.s32 %v334, 16
    %v351 = vcvt.s32.f32 %v349
    %v352 = vcvt.s32.f32 %v350
    %353 = vmin.xlane.f32.xlu0 %v352
    %v354 = vpop.xlane.xlu0 %353
    %vm355 = vcmp.eq.f32.partialorder %v352, %v354
    %v356 = vsel %vm355, %v351, inf
    %357 = vmin.xlane.f32.xlu0 %v356
    %v358 = vpop.xlane.xlu0 %357
    %v359 = vcvt.f32.s32 %v358
    %v360 = vcvt.f32.s32 %v354
    %v361 = vshll.u32 %v360, 16
    %v362 = vadd.s32 %v361, %v359
    %vm363 = vcmp.eq.s32.totalorder %v140, %v348
    %vm364 = vcmp.eq.s32.totalorder %v140, %v362
    %v365 = vsel %vm151, 1, 0
    %v366 = vsel %vm152, 1, 0
    %vm367 = vcmp.eq.s32.totalorder %v365, 1
    %vm368 = vcmp.eq.s32.totalorder %v366, 1
    %vm369 = vmand %vm367, %vm363
    %vm370 = vmand %vm368, %vm364
    %v371 = vsel %vm369, 1.0, 0.0
    %v372 = vsel %vm370, 1.0, 0.0
    %v373 = vadd.f32 %v371, %v372
    %v374 = vrot.slane %v373, 4
    %v375 = vadd.f32 %v373, %v374
    %v376 = vrot.slane %v375, 2
    %v377 = vadd.f32 %v375, %v376
    %v378 = vrot.slane %v377, 1
    %v379 = vadd.f32 %v377, %v378
    %380 = vst [vmem:[#allocation6] sm:$0x1] %v379
    // Predicated region
    $region30: #{tpu_custom_call.1} parent=1 // pred_check
      _
    $region31: #{tpu_custom_call.1} parent=1 // pred_check_branch
      %382 = sbr.rel (0) target = $region33
    $region32: #{tpu_custom_call.1} parent=1 // pred_region
      %s384 = ssub.s32 256, 256
      %385 = vsyncadd [#allocation3], %s384
      %s386 = sshll.u32 [#allocation5], 4
      %s387 = int_to_ptr.vmem [resolvable:$true] %s386
      %392 = dma.vmem_to_hbm [thread:$0]  %s387, 256, %s6, [#allocation3], 128, 128, 8
    $region33: #{tpu_custom_call.1} parent=1 // pred_fallthru
      _
    // Predicated region
    $region34: #{tpu_custom_call.1} parent=1 // pred_check
      _
    $region35: #{tpu_custom_call.1} parent=1 // pred_check_branch
      %394 = sbr.rel (0) target = $region37
    $region36: #{tpu_custom_call.1} parent=1 // pred_region
      %s396 = ssub.s32 16, 16
      %397 = vsyncadd [#allocation7], %s396
      %s399 = sshll.u32 [#allocation6], 4
      %s400 = int_to_ptr.vmem [resolvable:$true] %s399
      %402 = dma.vmem_to_hbm [thread:$0]  %s400, 16, %s7, [#allocation7]
    $region37: #{tpu_custom_call.1} parent=1 // pred_fallthru
      _
    // Predicated region
    $region38: #{tpu_custom_call.1} parent=1 // pred_check
      _
    $region39: #{tpu_custom_call.1} parent=1 // pred_check_branch
      %404 = sbr.rel (0) target = $region41
    $region40: #{tpu_custom_call.1} parent=1 // pred_region
      %s406 = ssub.s32 16, 16
      %407 = vsyncadd [#allocation7], %s406
      %s409 = sshll.u32 [#allocation8], 4
      %s410 = int_to_ptr.vmem [resolvable:$true] %s409
      %412 = dma.vmem_to_hbm [thread:$0]  %s410, 16, %s8, [#allocation7]
    $region41: #{tpu_custom_call.1} parent=1 // pred_fallthru
      _
    // Predicated region
    $region42: #{tpu_custom_call.1} parent=1 // pred_check
      _
    $region43: #{tpu_custom_call.1} parent=1 // pred_check_branch
      %414 = sbr.rel (0) target = $region45
    $region44: #{tpu_custom_call.1} parent=1 // pred_region
      %415 = dma.done [#allocation3], 256
    $region45: #{tpu_custom_call.1} parent=1 // pred_fallthru
      _
    // Predicated region
    $region46: #{tpu_custom_call.1} parent=1 // pred_check
      _
    $region47: #{tpu_custom_call.1} parent=1 // pred_check_branch
      %417 = sbr.rel (0) target = $region49
    $region48: #{tpu_custom_call.1} parent=1 // pred_region
      %418 = dma.done [#allocation7], 16
    $region49: #{tpu_custom_call.1} parent=1 // pred_fallthru
      _
    // Predicated region
    $region50: #{tpu_custom_call.1} parent=1 // pred_check
      _
    $region51: #{tpu_custom_call.1} parent=1 // pred_check_branch
      %420 = sbr.rel (0) target = $region53
    $region52: #{tpu_custom_call.1} parent=1 // pred_region
      %421 = dma.done [#allocation7], 16
    $region53: #{tpu_custom_call.1} parent=1 // pred_fallthru
      _
    %422 = vsyncpa [#allocation3], 1
    %423 = vsyncpa [#allocation7], 1
    %424 = vsyncpa [#allocation4], 1

</llo_original>
